<compile_context>
chip_gen: v5e
topology: v5e:2x2
jax: 0.10.0
libtpu: 0.0.40
codegen_flags: <defaults>
</compile_context>

<pallas_src>
import functools

import jax
import jax.numpy as jnp
import numpy as np
from jax import lax
from jax.experimental import pallas as pl
from jax.experimental.pallas import tpu as pltpu

N_FFT = 256
HOP = 16
N_FREQ = N_FFT // 2 + 1          # 129
_CHUNKS_PER_FRAME = N_FFT // HOP  # 16


def _round_up(a: int, b: int) -> int:
    return (a + b - 1) // b * b


@functools.cache
def _fused_dft_matrix_t() -> jnp.ndarray:
    """Window-folded, packed DFT matrix, transposed: shape (256, 256).

    Packed column layout (before transpose):
      col f in [0, 128]   : hann[s] *  cos(2*pi*s*f/256)        (Re, k = 0..128)
      col f in [129, 255] : hann[s] * -sin(2*pi*s*(f-128)/256)  (Im, k = 1..127)
    (sin k=0 is identically zero, so that slot carries the Nyquist cos column.)
    """
    n = np.arange(N_FFT, dtype=np.float64)
    # torch.hann_window(n_fft) is periodic: 0.5 * (1 - cos(2*pi*n / n_fft))
    win = 0.5 * (1.0 - np.cos(2.0 * np.pi * n / N_FFT))
    f = np.arange(N_FFT)
    k = np.where(f <= 128, f, f - 128)
    ang = 2.0 * np.pi * np.outer(n, k) / N_FFT          # (sample, packed_freq)
    trig = np.where(f[None, :] <= 128, np.cos(ang), -np.sin(ang))
    w = win[:, None] * trig                              # (256 samples, 256 packed)
    return jnp.asarray(w.T, dtype=jnp.float32)           # (256 packed, 256 samples)


def _spectrogram_kernel(cur_ref, tail_ref, wt_ref, out_ref, frames_ref):
    """One (batch, frame-tile) step.

    cur_ref    : (1, 16, TILE_M)  hop-chunks (transposed) for this tile's frames
    tail_ref   : (1, 16, 128)     next 128 chunks (only the first 15 are needed)
    wt_ref     : (256, 256)       packed, window-folded DFT matrix (transposed)
    out_ref    : (1, 129, TILE_M) magnitude spectrogram block, (freq, time) order
    frames_ref : (256, TILE_M)    VMEM scratch holding frames^T for the matmul
    """
    tile_m = out_ref.shape[2]
    cur = cur_ref[0]                                   # (16, TILE_M)
    tail = tail_ref[0]                                 # (16, 128)
    big = jnp.concatenate([cur, tail], axis=1)         # (16, TILE_M + 128)

    # Build frames^T in VMEM: frames^T[16*j + t, m] = chunk[m + j, t].
    # 16 static lane-shifted copies instead of a 16x HBM frame expansion.
    for j in range(_CHUNKS_PER_FRAME):
        frames_ref[j * HOP:(j + 1) * HOP, :] = big[:, j:j + tile_m]

    # Single fused full-K MXU matmul: (256, 256) @ (256, TILE_M).
    st = jnp.dot(wt_ref[...], frames_ref[...],
                 preferred_element_type=jnp.float32)   # (256, TILE_M)

    re = st[0:128, :]          # Re_k, k = 0..127
    lo = st[128:256, :]        # row 0 = Re_128 (Nyquist), rows 1..127 = Im_k
    row = lax.broadcasted_iota(jnp.int32, (128, tile_m), 0)
    im2 = jnp.where(row == 0, 0.0, lo * lo)            # Im_0 == 0
    out_ref[0, 0:128, :] = jnp.sqrt(re * re + im2)     # bins 0..127
    out_ref[0, 128:129, :] = jnp.abs(lo[0:1, :])       # bin 128 (Im_128 == 0)


@jax.jit
def transform_forward(x: jnp.ndarray) -> jnp.ndarray:
    """Equivalent of Transform.forward: (B, T) -> (B, 129, 1 + T // 16)."""
    assert x.ndim == 2, "expected (batch, time)"
    B, T = x.shape
    if T <= N_FFT // 2:
        raise ValueError("reflect padding requires time dim > n_fft//2 = 128")

    n_frames = 1 + T // HOP
    tile_m = min(512, _round_up(n_frames, 128))        # lane-dense frame tile
    n_frames_pad = _round_up(n_frames, tile_m)
    n_tiles = n_frames_pad // tile_m
    c_pad = n_frames_pad + 128                          # chunks incl. lookahead

    # center=True reflect padding (matches torch.stft pad_mode='reflect'),
    # then zero-pad so every (tile + lookahead) chunk block is in-bounds.
    pad = N_FFT // 2
    xp = jnp.pad(x.astype(jnp.float32), ((0, 0), (pad, pad)), mode="reflect")
    xp = jnp.pad(xp, ((0, 0), (0, HOP * c_pad - xp.shape[1])))

    # Hop-sized chunks, transposed so frames land lane-major in the kernel:
    # chunks_t[b, t, c] = xp[b, 16*c + t]   -> shape (B, 16, c_pad)
    chunks_t = xp.reshape(B, c_pad, HOP).transpose(0, 2, 1)
    wt = _fused_dft_matrix_t()

    out = pl.pallas_call(
        _spectrogram_kernel,
        out_shape=jax.ShapeDtypeStruct((B, N_FREQ, n_frames_pad), jnp.float32),
        grid_spec=pltpu.PrefetchScalarGridSpec(
            num_scalar_prefetch=0,
            grid=(B, n_tiles),
            in_specs=[
                # current tile's chunks (16, TILE_M)
                pl.BlockSpec((1, HOP, tile_m), lambda b, i: (b, 0, i)),
                # lookahead chunks for the overlapping frame tails
                pl.BlockSpec((1, HOP, 128),
                             lambda b, i: (b, 0, (i + 1) * (tile_m // 128))),
                # fused DFT matrix, resident across the whole grid
                pl.BlockSpec((N_FFT, N_FFT), lambda b, i: (0, 0)),
            ],
            out_specs=pl.BlockSpec((1, N_FREQ, tile_m), lambda b, i: (b, 0, i)),
            scratch_shapes=[pltpu.VMEM((N_FFT, tile_m), jnp.float32)],
        ),
        compiler_params=pltpu.CompilerParams(
            dimension_semantics=("parallel", "parallel")),
    )(chunks_t, chunks_t, wt)

    # Drop the padded frames; output is already in (freq, time) order.
    return out[:, :, :n_frames]


if __name__ == "__main__":
    key = jax.random.PRNGKey(0)
    B, T = 2, 512  # small waveform; T must exceed n_fft//2 for reflect pad
    x = jax.random.normal(key, (B, T), dtype=jnp.float32)

    spec = transform_forward(x)
    jax.block_until_ready(spec)

    expected_shape = (B, N_FREQ, 1 + T // HOP)  # (2, 129, 33)
    assert spec.shape == expected_shape, (spec.shape, expected_shape)
    assert bool(jnp.all(jnp.isfinite(spec)))

    # Cross-check against a pure-JAX rFFT reference (same math, no Pallas).
    pad = N_FFT // 2
    xp = jnp.pad(x, ((0, 0), (pad, pad)), mode="reflect")
    idx = jnp.arange(1 + T // HOP)[:, None] * HOP + jnp.arange(N_FFT)[None, :]
    n = jnp.arange(N_FFT, dtype=jnp.float32)
    win = 0.5 * (1.0 - jnp.cos(2.0 * jnp.pi * n / N_FFT))
    ref = jnp.abs(jnp.fft.rfft(xp[:, idx] * win, axis=-1)).transpose(0, 2, 1)
    err = float(jnp.max(jnp.abs(spec - ref)))
    assert err < 1e-2, err

    print("KERNEL_OK")
</pallas_src>

<mosaic_0001>
module attributes {stable_mosaic.version = 11 : i64} {
  func.func @_spectrogram_kernel(%arg0: i32, %arg1: i32, %arg2: memref<1x16x128xf32, #tpu.memory_space<vmem>>, %arg3: memref<1x16x128xf32, #tpu.memory_space<vmem>>, %arg4: memref<256x256xf32, #tpu.memory_space<vmem>>, %arg5: memref<1x129x128xf32, #tpu.memory_space<vmem>>, %arg6: memref<256x128xf32, #tpu.memory_space<vmem>>) attributes {dimension_semantics = [#tpu.dimension_semantics<parallel>, #tpu.dimension_semantics<parallel>], iteration_bounds = array<i64: 2, 1>, scalar_prefetch = 0 : i64, scratch_operands = 1 : i64, tpu.core_type = #tpu.core_type<tc>, window_params = [{transform_indices = @transform_0, window_bounds = array<i64: 1, 16, 128>}, {transform_indices = @transform_1, window_bounds = array<i64: 1, 16, 128>}, {pipeline_mode = #tpu.pipeline_mode<synchronous>, transform_indices = @transform_2, window_bounds = array<i64: 256, 256>}, {transform_indices = @transform_3, window_bounds = array<i64: 1, 129, 128>}]} {
    %c0 = arith.constant 0 : index
    %c0_0 = arith.constant 0 : index
    %c0_1 = arith.constant 0 : index
    %0 = vector.load %arg2[%c0, %c0_0, %c0_1] : memref<1x16x128xf32, #tpu.memory_space<vmem>>, vector<1x16x128xf32>
    %1 = vector.shape_cast %0 : vector<1x16x128xf32> to vector<16x128xf32>
    %c0_2 = arith.constant 0 : index
    %c0_3 = arith.constant 0 : index
    %c0_4 = arith.constant 0 : index
    %2 = vector.load %arg3[%c0_2, %c0_3, %c0_4] : memref<1x16x128xf32, #tpu.memory_space<vmem>>, vector<1x16x128xf32>
    %3 = vector.shape_cast %2 : vector<1x16x128xf32> to vector<16x128xf32>
    %4 = tpu.concatenate %1, %3 in 1 : vector<16x128xf32>, vector<16x128xf32> -> vector<16x256xf32>
    %5 = vector.extract_strided_slice %4 {offsets = [0, 0], sizes = [16, 128], strides = [1, 1]} : vector<16x256xf32> to vector<16x128xf32>
    %c0_5 = arith.constant 0 : index
    %c0_6 = arith.constant 0 : index
    %6 = vector.load %arg6[%c0_5, %c0_6] : memref<256x128xf32, #tpu.memory_space<vmem>>, vector<16x128xf32>
    tpu.vector_store %arg6[%c0_5, %c0_6], %5 {strides = array<i32>} : memref<256x128xf32, #tpu.memory_space<vmem>>, vector<16x128xf32>,
    %7 = vector.extract_strided_slice %4 {offsets = [0, 1], sizes = [16, 128], strides = [1, 1]} : vector<16x256xf32> to vector<16x128xf32>
    %c16 = arith.constant 16 : index
    %c0_7 = arith.constant 0 : index
    %8 = vector.load %arg6[%c16, %c0_7] : memref<256x128xf32, #tpu.memory_space<vmem>>, vector<16x128xf32>
    tpu.vector_store %arg6[%c16, %c0_7], %7 {strides = array<i32>} : memref<256x128xf32, #tpu.memory_space<vmem>>, vector<16x128xf32>,
    %9 = vector.extract_strided_slice %4 {offsets = [0, 2], sizes = [16, 128], strides = [1, 1]} : vector<16x256xf32> to vector<16x128xf32>
    %c32 = arith.constant 32 : index
    %c0_8 = arith.constant 0 : index
    %10 = vector.load %arg6[%c32, %c0_8] : memref<256x128xf32, #tpu.memory_space<vmem>>, vector<16x128xf32>
    tpu.vector_store %arg6[%c32, %c0_8], %9 {strides = array<i32>} : memref<256x128xf32, #tpu.memory_space<vmem>>, vector<16x128xf32>,
    %11 = vector.extract_strided_slice %4 {offsets = [0, 3], sizes = [16, 128], strides = [1, 1]} : vector<16x256xf32> to vector<16x128xf32>
    %c48 = arith.constant 48 : index
    %c0_9 = arith.constant 0 : index
    %12 = vector.load %arg6[%c48, %c0_9] : memref<256x128xf32, #tpu.memory_space<vmem>>, vector<16x128xf32>
    tpu.vector_store %arg6[%c48, %c0_9], %11 {strides = array<i32>} : memref<256x128xf32, #tpu.memory_space<vmem>>, vector<16x128xf32>,
    %13 = vector.extract_strided_slice %4 {offsets = [0, 4], sizes = [16, 128], strides = [1, 1]} : vector<16x256xf32> to vector<16x128xf32>
    %c64 = arith.constant 64 : index
    %c0_10 = arith.constant 0 : index
    %14 = vector.load %arg6[%c64, %c0_10] : memref<256x128xf32, #tpu.memory_space<vmem>>, vector<16x128xf32>
    tpu.vector_store %arg6[%c64, %c0_10], %13 {strides = array<i32>} : memref<256x128xf32, #tpu.memory_space<vmem>>, vector<16x128xf32>,
    %15 = vector.extract_strided_slice %4 {offsets = [0, 5], sizes = [16, 128], strides = [1, 1]} : vector<16x256xf32> to vector<16x128xf32>
    %c80 = arith.constant 80 : index
    %c0_11 = arith.constant 0 : index
    %16 = vector.load %arg6[%c80, %c0_11] : memref<256x128xf32, #tpu.memory_space<vmem>>, vector<16x128xf32>
    tpu.vector_store %arg6[%c80, %c0_11], %15 {strides = array<i32>} : memref<256x128xf32, #tpu.memory_space<vmem>>, vector<16x128xf32>,
    %17 = vector.extract_strided_slice %4 {offsets = [0, 6], sizes = [16, 128], strides = [1, 1]} : vector<16x256xf32> to vector<16x128xf32>
    %c96 = arith.constant 96 : index
    %c0_12 = arith.constant 0 : index
    %18 = vector.load %arg6[%c96, %c0_12] : memref<256x128xf32, #tpu.memory_space<vmem>>, vector<16x128xf32>
    tpu.vector_store %arg6[%c96, %c0_12], %17 {strides = array<i32>} : memref<256x128xf32, #tpu.memory_space<vmem>>, vector<16x128xf32>,
    %19 = vector.extract_strided_slice %4 {offsets = [0, 7], sizes = [16, 128], strides = [1, 1]} : vector<16x256xf32> to vector<16x128xf32>
    %c112 = arith.constant 112 : index
    %c0_13 = arith.constant 0 : index
    %20 = vector.load %arg6[%c112, %c0_13] : memref<256x128xf32, #tpu.memory_space<vmem>>, vector<16x128xf32>
    tpu.vector_store %arg6[%c112, %c0_13], %19 {strides = array<i32>} : memref<256x128xf32, #tpu.memory_space<vmem>>, vector<16x128xf32>,
    %21 = vector.extract_strided_slice %4 {offsets = [0, 8], sizes = [16, 128], strides = [1, 1]} : vector<16x256xf32> to vector<16x128xf32>
    %c128 = arith.constant 128 : index
    %c0_14 = arith.constant 0 : index
    %22 = vector.load %arg6[%c128, %c0_14] : memref<256x128xf32, #tpu.memory_space<vmem>>, vector<16x128xf32>
    tpu.vector_store %arg6[%c128, %c0_14], %21 {strides = array<i32>} : memref<256x128xf32, #tpu.memory_space<vmem>>, vector<16x128xf32>,
    %23 = vector.extract_strided_slice %4 {offsets = [0, 9], sizes = [16, 128], strides = [1, 1]} : vector<16x256xf32> to vector<16x128xf32>
    %c144 = arith.constant 144 : index
    %c0_15 = arith.constant 0 : index
    %24 = vector.load %arg6[%c144, %c0_15] : memref<256x128xf32, #tpu.memory_space<vmem>>, vector<16x128xf32>
    tpu.vector_store %arg6[%c144, %c0_15], %23 {strides = array<i32>} : memref<256x128xf32, #tpu.memory_space<vmem>>, vector<16x128xf32>,
    %25 = vector.extract_strided_slice %4 {offsets = [0, 10], sizes = [16, 128], strides = [1, 1]} : vector<16x256xf32> to vector<16x128xf32>
    %c160 = arith.constant 160 : index
    %c0_16 = arith.constant 0 : index
    %26 = vector.load %arg6[%c160, %c0_16] : memref<256x128xf32, #tpu.memory_space<vmem>>, vector<16x128xf32>
    tpu.vector_store %arg6[%c160, %c0_16], %25 {strides = array<i32>} : memref<256x128xf32, #tpu.memory_space<vmem>>, vector<16x128xf32>,
    %27 = vector.extract_strided_slice %4 {offsets = [0, 11], sizes = [16, 128], strides = [1, 1]} : vector<16x256xf32> to vector<16x128xf32>
    %c176 = arith.constant 176 : index
    %c0_17 = arith.constant 0 : index
    %28 = vector.load %arg6[%c176, %c0_17] : memref<256x128xf32, #tpu.memory_space<vmem>>, vector<16x128xf32>
    tpu.vector_store %arg6[%c176, %c0_17], %27 {strides = array<i32>} : memref<256x128xf32, #tpu.memory_space<vmem>>, vector<16x128xf32>,
    %29 = vector.extract_strided_slice %4 {offsets = [0, 12], sizes = [16, 128], strides = [1, 1]} : vector<16x256xf32> to vector<16x128xf32>
    %c192 = arith.constant 192 : index
    %c0_18 = arith.constant 0 : index
    %30 = vector.load %arg6[%c192, %c0_18] : memref<256x128xf32, #tpu.memory_space<vmem>>, vector<16x128xf32>
    tpu.vector_store %arg6[%c192, %c0_18], %29 {strides = array<i32>} : memref<256x128xf32, #tpu.memory_space<vmem>>, vector<16x128xf32>,
    %31 = vector.extract_strided_slice %4 {offsets = [0, 13], sizes = [16, 128], strides = [1, 1]} : vector<16x256xf32> to vector<16x128xf32>
    %c208 = arith.constant 208 : index
    %c0_19 = arith.constant 0 : index
    %32 = vector.load %arg6[%c208, %c0_19] : memref<256x128xf32, #tpu.memory_space<vmem>>, vector<16x128xf32>
    tpu.vector_store %arg6[%c208, %c0_19], %31 {strides = array<i32>} : memref<256x128xf32, #tpu.memory_space<vmem>>, vector<16x128xf32>,
    %33 = vector.extract_strided_slice %4 {offsets = [0, 14], sizes = [16, 128], strides = [1, 1]} : vector<16x256xf32> to vector<16x128xf32>
    %c224 = arith.constant 224 : index
    %c0_20 = arith.constant 0 : index
    %34 = vector.load %arg6[%c224, %c0_20] : memref<256x128xf32, #tpu.memory_space<vmem>>, vector<16x128xf32>
    tpu.vector_store %arg6[%c224, %c0_20], %33 {strides = array<i32>} : memref<256x128xf32, #tpu.memory_space<vmem>>, vector<16x128xf32>,
    %35 = vector.extract_strided_slice %4 {offsets = [0, 15], sizes = [16, 128], strides = [1, 1]} : vector<16x256xf32> to vector<16x128xf32>
    %c240 = arith.constant 240 : index
    %c0_21 = arith.constant 0 : index
    %36 = vector.load %arg6[%c240, %c0_21] : memref<256x128xf32, #tpu.memory_space<vmem>>, vector<16x128xf32>
    tpu.vector_store %arg6[%c240, %c0_21], %35 {strides = array<i32>} : memref<256x128xf32, #tpu.memory_space<vmem>>, vector<16x128xf32>,
    %c0_22 = arith.constant 0 : index
    %c0_23 = arith.constant 0 : index
    %37 = vector.load %arg4[%c0_22, %c0_23] : memref<256x256xf32, #tpu.memory_space<vmem>>, vector<256x256xf32>
    %c0_24 = arith.constant 0 : index
    %c0_25 = arith.constant 0 : index
    %38 = vector.load %arg6[%c0_24, %c0_25] : memref<256x128xf32, #tpu.memory_space<vmem>>, vector<256x128xf32>
    %cst = arith.constant dense<0.000000e+00> : vector<256x128xf32>
    %39 = tpu.matmul %37, %38, %cst {dimension_numbers = #tpu.dot_dimension_numbers<[1], [0], [0], [1], [0, 0, 1, 1], [], []>} : vector<256x256xf32>, vector<256x128xf32>, vector<256x128xf32> -> vector<256x128xf32>
    %40 = vector.extract_strided_slice %39 {offsets = [0, 0], sizes = [128, 128], strides = [1, 1]} : vector<256x128xf32> to vector<128x128xf32>
    %41 = vector.extract_strided_slice %39 {offsets = [128, 0], sizes = [128, 128], strides = [1, 1]} : vector<256x128xf32> to vector<128x128xf32>
    %42 = tpu.iota {dimensions = array<i32: 0>} : vector<128x128xi32>
    %c0_i32 = arith.constant 0 : i32
    %43 = vector.broadcast %c0_i32 : i32 to vector<128x128xi32>
    %44 = arith.cmpi eq, %42, %43 : vector<128x128xi32>
    %45 = arith.mulf %41, %41 : vector<128x128xf32>
    %cst_26 = arith.constant 0.000000e+00 : f32
    %46 = vector.broadcast %cst_26 : f32 to vector<128x128xf32>
    %47 = arith.select %44, %46, %45 : vector<128x128xi1>, vector<128x128xf32>
    %48 = arith.mulf %40, %40 : vector<128x128xf32>
    %49 = arith.addf %48, %47 : vector<128x128xf32>
    %50 = math.sqrt %49 : vector<128x128xf32>
    %c0_27 = arith.constant 0 : index
    %c0_28 = arith.constant 0 : index
    %c0_29 = arith.constant 0 : index
    %51 = vector.load %arg5[%c0_27, %c0_28, %c0_29] : memref<1x129x128xf32, #tpu.memory_space<vmem>>, vector<1x128x128xf32>
    %52 = vector.shape_cast %51 : vector<1x128x128xf32> to vector<128x128xf32>
    %53 = vector.shape_cast %50 : vector<128x128xf32> to vector<1x128x128xf32>
    tpu.vector_store %arg5[%c0_27, %c0_28, %c0_29], %53 {strides = array<i32>} : memref<1x129x128xf32, #tpu.memory_space<vmem>>, vector<1x128x128xf32>,
    %54 = vector.extract_strided_slice %41 {offsets = [0, 0], sizes = [1, 128], strides = [1, 1]} : vector<128x128xf32> to vector<1x128xf32>
    %55 = math.absf %54 : vector<1x128xf32>
    %c0_30 = arith.constant 0 : index
    %c128_31 = arith.constant 128 : index
    %c0_32 = arith.constant 0 : index
    %56 = vector.load %arg5[%c0_30, %c128_31, %c0_32] : memref<1x129x128xf32, #tpu.memory_space<vmem>>, vector<1x1x128xf32>
    %57 = vector.shape_cast %56 : vector<1x1x128xf32> to vector<1x128xf32>
    %58 = vector.shape_cast %55 : vector<1x128xf32> to vector<1x1x128xf32>
    tpu.vector_store %arg5[%c0_30, %c128_31, %c0_32], %58 {strides = array<i32>} : memref<1x129x128xf32, #tpu.memory_space<vmem>>, vector<1x1x128xf32>,
    return
  }
  func.func @transform_0(%arg0: i32, %arg1: i32) -> (i32, i32, i32) {
    %c0_i32 = arith.constant 0 : i32
    %c0_i32_0 = arith.constant 0 : i32
    return %arg0, %c0_i32, %arg1 : i32, i32, i32
  }
  func.func @transform_1(%arg0: i32, %arg1: i32) -> (i32, i32, i32) {
    %c1_i32 = arith.constant 1 : i32
    %0 = arith.addi %arg1, %c1_i32 : i32
    %c1_i32_0 = arith.constant 1 : i32
    %1 = arith.muli %0, %c1_i32_0 : i32
    %c0_i32 = arith.constant 0 : i32
    %c0_i32_1 = arith.constant 0 : i32
    return %arg0, %c0_i32, %1 : i32, i32, i32
  }
  func.func @transform_2(%arg0: i32, %arg1: i32) -> (i32, i32) {
    %c0_i32 = arith.constant 0 : i32
    %c0_i32_0 = arith.constant 0 : i32
    %c0_i32_1 = arith.constant 0 : i32
    return %c0_i32, %c0_i32_0 : i32, i32
  }
  func.func @transform_3(%arg0: i32, %arg1: i32) -> (i32, i32, i32) {
    %c0_i32 = arith.constant 0 : i32
    %c0_i32_0 = arith.constant 0 : i32
    return %arg0, %c0_i32, %arg1 : i32, i32, i32
  }
}

</mosaic_0001>

<llo_original>
// kernel: transform_forward.1
$region0: #{transform_forward.1}
  #allocation0 [shape = 'u32[]', space=smem, size = 0x4, offset = 0x4, fixed_abs, tag = 'smem constant byte address 0x4 - core index']
  #allocation1 [shape = 'u32[72,128]{1,0:T(1,128)}', space=vmem, size = 0x9000, scoped, tag = 'internal scratch']
  #allocation2 [shape = 'f32[256,128]{1,0:T(8,128)}', space=vmem, size = 0x20000, scoped, tag = 'scratch operand']
  %s0 = inlined_call_operand.vmem [shape: f32[2,16,256], index: 0, kind: input, shape index: {}, may-alias: {0,1}]
  %s1 = inlined_call_operand.vmem [shape: f32[2,16,256], index: 1, kind: input, shape index: {}, may-alias: {0,1}]
  %s2 = inlined_call_operand.vmem [shape: f32[256,256], index: 2, kind: input, shape index: {}]
  %s3 = inlined_call_operand.vmem [shape: f32[2,129,128], index: 3, kind: output, shape index: {}]
  %s4 = sld [smem:[#allocation0]]
  $region121: #{transform_forward.1} parent=0
    _
  %s6 = ssub.s32 1, %s4
  %s7 = scalar_select 0, %s6, %s4
  $region1: #{transform_forward.1} parent=0
    #allocation3 [shape = 'u8[16384]{0}', space=vmem, size = 0x4000, scoped, tag = 'input window, operand 0']
    #allocation4 [shape = 'u8[16384]{0}', space=vmem, size = 0x4000, scoped, tag = 'input window, operand 1']
    loop: start=0, step=1, limit=4
    $region2: #{transform_forward.1} parent=1 // loop_pre_header
      _
    $region3: #{transform_forward.1} parent=1 // loop_header
      %s9 = sphi 0, %s13
      %p10 = scmp.ge.s32.totalorder %s9, 4
      %s16 = sphi 0, %s28
      %s17 = sphi 0, %s24
      %s18 = sphi 0, %s16
      %s19 = sphi 0, %s17
      %s20 = sphi 0, %s18
      %s21 = sphi 0, %s19
      %s33 = sphi 0, %s35
      %s36 = sphi 0, %s33
      %s37 = sphi 0, %s36
      %s53 = sphi 0, %s37
      %s63 = sphi 0, %s65
      %s66 = sphi 0, %s63
      %s67 = sphi 0, %s66
      %s83 = sphi 0, %s67
      %s87 = sphi 0, %s87
      %s89 = sphi 0, %s87
      %s90 = sphi 0, %s89
      %s104 = sphi 0, %s90
      %s112 = sphi 0, %s114
      %s115 = sphi 0, %s112
      %s116 = sphi 0, %s115
      %s132 = sphi 0, %s116
    $region4: #{transform_forward.1} parent=1 // loop_header_branch
      %12 = sbr.rel (%p10) target = $region8
    $region5: #{transform_forward.1} parent=1 // loop_body
      %s14 = ssub.s32 %s9, 1
      %s15 = ssub.s32 %s9, 2
      %s22 = sadd.s32 1, %s17
      %p23 = scmp.ge.s32.totalorder %s22, 1
      %s24 = scalar_select %p23, 0, %s22
      %s25 = sadd.s32 1, %s16
      %s26 = scalar_select %p23, %s25, %s16
      %p27 = scmp.ge.s32.totalorder %s26, 2
      %s28 = scalar_select %p27, 0, %s26
      %s29 = ssub.s32 %s16, %s28
      %s30 = ssub.s32 %s17, %s24
      %s31 = sor.u32 %s29, %s30
      %p32 = scmp.eq.s32.totalorder %s31, 0
      %s34 = sadd.s32 %s33, 1
      %s35 = scalar_select %p32, %s33, %s34
      %p38 = pneg %p32
      %p39 = scmp.eq.s32.totalorder %s9, 1
      %p40 = por %p38, %p39
      %p41 = scmp.ne.s32.totalorder %s33, %s36
      %p42 = scmp.eq.s32.totalorder %s9, 0
      %p43 = por %p41, %p42
      %p44 = scmp.ne.s32.totalorder %s33, %s36
      %p45 = scmp.eq.s32.totalorder %s14, 1
      %p46 = por %p44, %p45
      %p47 = scmp.ne.s32.totalorder %s36, %s37
      %p48 = scmp.eq.s32.totalorder %s14, 0
      %p49 = por %p47, %p48
      %p50 = scmp.ne.s32.totalorder %s36, %s37
      %p51 = scmp.eq.s32.totalorder %s15, 1
      %p52 = por %p50, %p51
      %p54 = scmp.ne.s32.totalorder %s37, %s53
      %p55 = scmp.eq.s32.totalorder %s15, 0
      %p56 = por %p54, %p55
      %s57 = sadd.s32 %s17, 1
      %s58 = sadd.s32 %s24, 1
      %s59 = ssub.s32 %s16, %s28
      %s60 = ssub.s32 %s57, %s58
      %s61 = sor.u32 %s59, %s60
      %p62 = scmp.eq.s32.totalorder %s61, 0
      %s64 = sadd.s32 %s63, 1
      %s65 = scalar_select %p62, %s63, %s64
      %p68 = pneg %p62
      %p69 = scmp.eq.s32.totalorder %s9, 1
      %p70 = por %p68, %p69
      %p71 = scmp.ne.s32.totalorder %s63, %s66
      %p72 = scmp.eq.s32.totalorder %s9, 0
      %p73 = por %p71, %p72
      %p74 = scmp.ne.s32.totalorder %s63, %s66
      %p75 = scmp.eq.s32.totalorder %s14, 1
      %p76 = por %p74, %p75
      %p77 = scmp.ne.s32.totalorder %s66, %s67
      %p78 = scmp.eq.s32.totalorder %s14, 0
      %p79 = por %p77, %p78
      %p80 = scmp.ne.s32.totalorder %s66, %s67
      %p81 = scmp.eq.s32.totalorder %s15, 1
      %p82 = por %p80, %p81
      %p84 = scmp.ne.s32.totalorder %s67, %s83
      %p85 = scmp.eq.s32.totalorder %s15, 0
      %p86 = por %p84, %p85
      %s88 = sadd.s32 %s87, 1
      %p91 = scmp.eq.s32.totalorder %s9, 1
      %p92 = scmp.ne.s32.totalorder %s87, %s89
      %p93 = scmp.eq.s32.totalorder %s9, 0
      %p94 = por %p92, %p93
      %p95 = scmp.ne.s32.totalorder %s87, %s89
      %p96 = scmp.eq.s32.totalorder %s14, 1
      %p97 = por %p95, %p96
      %p98 = scmp.ne.s32.totalorder %s89, %s90
      %p99 = scmp.eq.s32.totalorder %s14, 0
      %p100 = por %p98, %p99
      %p101 = scmp.ne.s32.totalorder %s89, %s90
      %p102 = scmp.eq.s32.totalorder %s15, 1
      %p103 = por %p101, %p102
      %p105 = scmp.ne.s32.totalorder %s90, %s104
      %p106 = scmp.eq.s32.totalorder %s15, 0
      %p107 = por %p105, %p106
      %s108 = ssub.s32 %s16, %s28
      %s109 = ssub.s32 %s17, %s24
      %s110 = sor.u32 %s108, %s109
      %p111 = scmp.eq.s32.totalorder %s110, 0
      %s113 = sadd.s32 %s112, 1
      %s114 = scalar_select %p111, %s112, %s113
      %p117 = pneg %p111
      %p118 = scmp.eq.s32.totalorder %s9, 1
      %p119 = por %p117, %p118
      %p120 = scmp.ne.s32.totalorder %s112, %s115
      %p121 = scmp.eq.s32.totalorder %s9, 0
      %p122 = por %p120, %p121
      %p123 = scmp.ne.s32.totalorder %s112, %s115
      %p124 = scmp.eq.s32.totalorder %s14, 1
      %p125 = por %p123, %p124
      %p126 = scmp.ne.s32.totalorder %s115, %s116
      %p127 = scmp.eq.s32.totalorder %s14, 0
      %p128 = por %p126, %p127
      %p129 = scmp.ne.s32.totalorder %s115, %s116
      %p130 = scmp.eq.s32.totalorder %s15, 1
      %p131 = por %p129, %p130
      %p133 = scmp.ne.s32.totalorder %s116, %s132
      %p134 = scmp.eq.s32.totalorder %s15, 0
      %p135 = por %p133, %p134
      %p136 = scmp.le.s32.totalorder 1, %s9
      %p137 = scmp.lt.s32.totalorder %s9, 3
      %p138 = pnand %p136, %p137
      %p139 = pneg %p138
      // Predicated region
      $region9: #{transform_forward.1} parent=5 // pred_check
        _
      $region10: #{transform_forward.1} parent=5 // pred_check_branch
        %141 = sbr.rel (%p138) target = $region12
      $region11: #{transform_forward.1} parent=5 // pred_region
        %s142 = ssub.s32 %s9, 1
        // Predicated region
        $region13: #{transform_forward.1} parent=11 // pred_check
          %p143 = pneg %p100
        $region14: #{transform_forward.1} parent=11 // pred_check_branch
          %145 = sbr.rel (%p143) target = $region16
        $region15: #{transform_forward.1} parent=11 // pred_region
          _
        $region16: #{transform_forward.1} parent=11 // pred_fallthru
          _
      $region12: #{transform_forward.1} parent=5 // pred_fallthru
        _
      %p146 = scmp.lt.s32.totalorder %s9, 2
      // Predicated region
      $region17: #{transform_forward.1} parent=5 // pred_check
        %p147 = pneg %p146
      $region18: #{transform_forward.1} parent=5 // pred_check_branch
        %149 = sbr.rel (%p147) target = $region20
      $region19: #{transform_forward.1} parent=5 // pred_region
        // Predicated region
        $region21: #{transform_forward.1} parent=19 // pred_check
          %p150 = pneg %p43
        $region22: #{transform_forward.1} parent=19 // pred_check_branch
          %152 = sbr.rel (%p150) target = $region24
        $region23: #{transform_forward.1} parent=19 // pred_region
          %s153 = sand.u32 %s33, 1
          %s154 = sand.u32 %s33, 1
          %s155 = smul.addr %s154, 16
          %s156 = scalar_lea.vmem [#allocation3], %s155
          %s157 = smul.addr %s16, 4
          %s158 = sadd.s32 %s17, %s157
          %s159 = smul.addr %s158, 8
          %s160 = scalar_lea.vmem %s0, %s159
          // Predicated region
          $region25: #{transform_forward.1} parent=23 // pred_check
            _
          $region26: #{transform_forward.1} parent=23 // pred_check_branch
            %162 = sbr.rel (0) target = $region28
          $region27: #{transform_forward.1} parent=23 // pred_region
            // Predicated region
            $region29: #{transform_forward.1} parent=27 // pred_check
              _
            $region30: #{transform_forward.1} parent=27 // pred_check_branch
              %164 = sbr.rel (0) target = $region32
            $region31: #{transform_forward.1} parent=27 // pred_region
              // Predicated region
              $region44: #{transform_forward.1} parent=31 // pred_check
                _
              $region45: #{transform_forward.1} parent=31 // pred_check_branch
                %182 = sbr.rel (0) target = $region47
              $region46: #{transform_forward.1} parent=31 // pred_region
                loop: start=0, step=1, limit=1
                $region48: #{transform_forward.1} parent=46 // loop_pre_header
                  _
                $region49: #{transform_forward.1} parent=46 // loop_header
                  %s184 = sphi 0, %s188
                  %p185 = scmp.ge.s32.totalorder %s184, 1
                  %s189 = sphi %s160, %s160
                  %s190 = sphi %s156, %s156
                $region50: #{transform_forward.1} parent=46 // loop_header_branch
                  %187 = sbr.rel (%p185) target = $region54
                $region51: #{transform_forward.1} parent=46 // loop_body
                  %v191 = vld [vmem:[%s189] sm:$0xff]
                  %192 = vst [vmem:[%s190] sm:$0xff] %v191
                  %v193 = vld [vmem:[%s189 + $0x10] sm:$0xff]
                  %194 = vst [vmem:[%s190 + $0x8] sm:$0xff] %v193
                $region52: #{transform_forward.1} parent=46 // loop_footer
                  %s188 = sadd.s32 1, %s184
                $region53: #{transform_forward.1} parent=46 // loop_footer_branch
                  %183 = sbr.rel target = $region49
                $region54: #{transform_forward.1} parent=46 // loop_exit
                  _
              $region47: #{transform_forward.1} parent=31 // pred_fallthru
                _
              // Predicated region
              $region55: #{transform_forward.1} parent=31 // pred_check
                _
              $region56: #{transform_forward.1} parent=31 // pred_check_branch
                %196 = sbr.rel target = $region58
              $region57: #{transform_forward.1} parent=31 // pred_region
                _
              $region58: #{transform_forward.1} parent=31 // pred_fallthru
                _
            $region32: #{transform_forward.1} parent=27 // pred_fallthru
              _
            // Predicated region
            $region33: #{transform_forward.1} parent=27 // pred_check
              _
            $region34: #{transform_forward.1} parent=27 // pred_check_branch
              %166 = sbr.rel target = $region36
            $region35: #{transform_forward.1} parent=27 // pred_region
              %s168 = ssub.s32 256, 1
              loop: start=0, step=1, limit=1
              $region37: #{transform_forward.1} parent=35 // loop_pre_header
                _
              $region38: #{transform_forward.1} parent=35 // loop_header
                %s170 = sphi 0, %s174
                %p171 = scmp.ge.s32.totalorder %s170, 1
                %s175 = sphi %s160, %s160
                %s176 = sphi %s156, %s156
              $region39: #{transform_forward.1} parent=35 // loop_header_branch
                %173 = sbr.rel (%p171) target = $region43
              $region40: #{transform_forward.1} parent=35 // loop_body
                %v177 = vld [vmem:[%s175] sm:%s168]
                %178 = vst [vmem:[%s176] sm:%s168] %v177
                %v179 = vld [vmem:[%s175 + $0x10] sm:%s168]
                %180 = vst [vmem:[%s176 + $0x8] sm:%s168] %v179
              $region41: #{transform_forward.1} parent=35 // loop_footer
                %s174 = sadd.s32 1, %s170
              $region42: #{transform_forward.1} parent=35 // loop_footer_branch
                %169 = sbr.rel target = $region38
              $region43: #{transform_forward.1} parent=35 // loop_exit
                _
            $region36: #{transform_forward.1} parent=27 // pred_fallthru
              _
          $region28: #{transform_forward.1} parent=23 // pred_fallthru
            _
          %197 = vnop
        $region24: #{transform_forward.1} parent=19 // pred_fallthru
          _
        // Predicated region
        $region59: #{transform_forward.1} parent=19 // pred_check
          %p198 = pneg %p73
        $region60: #{transform_forward.1} parent=19 // pred_check_branch
          %200 = sbr.rel (%p198) target = $region62
        $region61: #{transform_forward.1} parent=19 // pred_region
          %s201 = sand.u32 %s63, 1
          %s202 = sand.u32 %s63, 1
          %s203 = smul.addr %s202, 16
          %s204 = scalar_lea.vmem [#allocation4], %s203
          %s205 = sadd.s32 %s17, 1
          %s206 = smul.addr %s16, 4
          %s207 = sadd.s32 %s205, %s206
          %s208 = smul.addr %s207, 8
          %s209 = scalar_lea.vmem %s1, %s208
          // Predicated region
          $region63: #{transform_forward.1} parent=61 // pred_check
            _
          $region64: #{transform_forward.1} parent=61 // pred_check_branch
            %211 = sbr.rel (0) target = $region66
          $region65: #{transform_forward.1} parent=61 // pred_region
            // Predicated region
            $region67: #{transform_forward.1} parent=65 // pred_check
              _
            $region68: #{transform_forward.1} parent=65 // pred_check_branch
              %213 = sbr.rel (0) target = $region70
            $region69: #{transform_forward.1} parent=65 // pred_region
              // Predicated region
              $region82: #{transform_forward.1} parent=69 // pred_check
                _
              $region83: #{transform_forward.1} parent=69 // pred_check_branch
                %231 = sbr.rel (0) target = $region85
              $region84: #{transform_forward.1} parent=69 // pred_region
                loop: start=0, step=1, limit=1
                $region86: #{transform_forward.1} parent=84 // loop_pre_header
                  _
                $region87: #{transform_forward.1} parent=84 // loop_header
                  %s233 = sphi 0, %s237
                  %p234 = scmp.ge.s32.totalorder %s233, 1
                  %s238 = sphi %s209, %s209
                  %s239 = sphi %s204, %s204
                $region88: #{transform_forward.1} parent=84 // loop_header_branch
                  %236 = sbr.rel (%p234) target = $region92
                $region89: #{transform_forward.1} parent=84 // loop_body
                  %v240 = vld [vmem:[%s238] sm:$0xff]
                  %241 = vst [vmem:[%s239] sm:$0xff] %v240
                  %v242 = vld [vmem:[%s238 + $0x10] sm:$0xff]
                  %243 = vst [vmem:[%s239 + $0x8] sm:$0xff] %v242
                $region90: #{transform_forward.1} parent=84 // loop_footer
                  %s237 = sadd.s32 1, %s233
                $region91: #{transform_forward.1} parent=84 // loop_footer_branch
                  %232 = sbr.rel target = $region87
                $region92: #{transform_forward.1} parent=84 // loop_exit
                  _
              $region85: #{transform_forward.1} parent=69 // pred_fallthru
                _
              // Predicated region
              $region93: #{transform_forward.1} parent=69 // pred_check
                _
              $region94: #{transform_forward.1} parent=69 // pred_check_branch
                %245 = sbr.rel target = $region96
              $region95: #{transform_forward.1} parent=69 // pred_region
                _
              $region96: #{transform_forward.1} parent=69 // pred_fallthru
                _
            $region70: #{transform_forward.1} parent=65 // pred_fallthru
              _
            // Predicated region
            $region71: #{transform_forward.1} parent=65 // pred_check
              _
            $region72: #{transform_forward.1} parent=65 // pred_check_branch
              %215 = sbr.rel target = $region74
            $region73: #{transform_forward.1} parent=65 // pred_region
              %s217 = ssub.s32 256, 1
              loop: start=0, step=1, limit=1
              $region75: #{transform_forward.1} parent=73 // loop_pre_header
                _
              $region76: #{transform_forward.1} parent=73 // loop_header
                %s219 = sphi 0, %s223
                %p220 = scmp.ge.s32.totalorder %s219, 1
                %s224 = sphi %s209, %s209
                %s225 = sphi %s204, %s204
              $region77: #{transform_forward.1} parent=73 // loop_header_branch
                %222 = sbr.rel (%p220) target = $region81
              $region78: #{transform_forward.1} parent=73 // loop_body
                %v226 = vld [vmem:[%s224] sm:%s217]
                %227 = vst [vmem:[%s225] sm:%s217] %v226
                %v228 = vld [vmem:[%s224 + $0x10] sm:%s217]
                %229 = vst [vmem:[%s225 + $0x8] sm:%s217] %v228
              $region79: #{transform_forward.1} parent=73 // loop_footer
                %s223 = sadd.s32 1, %s219
              $region80: #{transform_forward.1} parent=73 // loop_footer_branch
                %218 = sbr.rel target = $region76
              $region81: #{transform_forward.1} parent=73 // loop_exit
                _
            $region74: #{transform_forward.1} parent=65 // pred_fallthru
              _
          $region66: #{transform_forward.1} parent=61 // pred_fallthru
            _
          %246 = vnop
        $region62: #{transform_forward.1} parent=19 // pred_fallthru
          _
      $region20: #{transform_forward.1} parent=5 // pred_fallthru
        _
      %p247 = scmp.le.s32.totalorder 1, %s9
      %p248 = scmp.lt.s32.totalorder %s9, 3
      %p249 = pnand %p247, %p248
      %p250 = pneg %p249
      // Predicated region
      $region97: #{transform_forward.1} parent=5 // pred_check
        _
      $region98: #{transform_forward.1} parent=5 // pred_check_branch
        %252 = sbr.rel (%p249) target = $region100
      $region99: #{transform_forward.1} parent=5 // pred_region
        %s253 = ssub.s32 %s9, 1
        %s254 = sand.u32 %s36, 1
        %s255 = sand.u32 %s36, 1
        %s256 = smul.addr %s255, 16
        %s257 = scalar_lea.vmem [#allocation3], %s256
        // Predicated region
        $region101: #{transform_forward.1} parent=99 // pred_check
          %p258 = pneg %p49
        $region102: #{transform_forward.1} parent=99 // pred_check_branch
          %260 = sbr.rel (%p258) target = $region104
        $region103: #{transform_forward.1} parent=99 // pred_region
          _
        $region104: #{transform_forward.1} parent=99 // pred_fallthru
          _
        %s261 = sand.u32 %s66, 1
        %s262 = sand.u32 %s66, 1
        %s263 = smul.addr %s262, 16
        %s264 = scalar_lea.vmem [#allocation4], %s263
        // Predicated region
        $region105: #{transform_forward.1} parent=99 // pred_check
          %p265 = pneg %p79
        $region106: #{transform_forward.1} parent=99 // pred_check_branch
          %267 = sbr.rel (%p265) target = $region108
        $region107: #{transform_forward.1} parent=99 // pred_region
          _
        $region108: #{transform_forward.1} parent=99 // pred_fallthru
          _
        %s268 = sand.u32 %s36, 1
        %s269 = sand.u32 %s36, 1
        %s270 = smul.addr %s269, 16
        %s271 = scalar_lea.vmem [#allocation3], %s270
        %p272 = pneg %p49
        %p273 = pneg %p46
        %s274 = sand.u32 %s66, 1
        %s275 = sand.u32 %s66, 1
        %s276 = smul.addr %s275, 16
        %s277 = scalar_lea.vmem [#allocation4], %s276
        %p278 = pneg %p79
        %p279 = pneg %p76
        %p280 = pneg %p100
        %p281 = pneg %p97
        %p282 = pneg %p128
        %p283 = pneg %p125
        %p284 = scmp.lt.s32.totalorder %s18, 1
        %s285 = scalar_select %p284, %s18, 1
        %p286 = scmp.lt.s32.totalorder %s19, 0
        %s287 = scalar_select %p286, %s19, 0
        %s288 = smul.addr %s285, 17
        %s289 = sadd.s32 %s287, %s288
        %s290 = smul.addr %s289, 8
        %s291 = scalar_lea.vmem %s3, %s290
        %s292 = sadd.s32 %s19, 1
        %p293 = scmp.lt.s32.totalorder %s18, 1
        %s294 = scalar_select %p293, %s18, 1
        %p295 = scmp.lt.s32.totalorder %s19, 0
        %s296 = scalar_select %p295, %s19, 0
        %s297 = smul.addr %s294, 17
        %s298 = sadd.s32 %s296, %s297
        %s299 = smul.addr %s298, 8
        %s300 = scalar_lea.vmem %s3, %s299
        %v301 = vld [vmem:[%s257] sm:$0xff]
        %v302 = vld [vmem:[%s257 + $0x8] sm:$0xff]
        %v303 = vld [vmem:[%s264] sm:$0xff]
        %v304 = vld [vmem:[%s264 + $0x8] sm:$0xff]
        %305 = vst [vmem:[#allocation2] sm:$0xff] %v301
        %306 = vst [vmem:[#allocation2 + $0x8] sm:$0xff] %v302
        %311 = vrot.lane.b32.xlu0 %v301, 127
        %v312 = vpop.permute.xlu0 %311
        %313 = vrot.lane.b32.xlu0 %v303, 127
        %v314 = vpop.permute.xlu0 %313
        %315 = vrot.lane.b32.xlu0 %v302, 127
        %v316 = vpop.permute.xlu0 %315
        %317 = vrot.lane.b32.xlu0 %v304, 127
        %v318 = vpop.permute.xlu0 %317
        %vm319 = vcmask 1039360
        %v320 = vsel %vm319, %v312, %v314
        %v321 = vsel %vm319, %v316, %v318
        %324 = vst [vmem:[#allocation2 + $0x10] sm:$0xff] %v320
        %325 = vst [vmem:[#allocation2 + $0x18] sm:$0xff] %v321
        %326 = vrot.lane.b32.xlu0 %v301, 126
        %v327 = vpop.permute.xlu0 %326
        %328 = vrot.lane.b32.xlu0 %v303, 126
        %v329 = vpop.permute.xlu0 %328
        %330 = vrot.lane.b32.xlu0 %v302, 126
        %v331 = vpop.permute.xlu0 %330
        %332 = vrot.lane.b32.xlu0 %v304, 126
        %v333 = vpop.permute.xlu0 %332
        %vm334 = vcmask 1031168
        %v335 = vsel %vm334, %v327, %v329
        %v336 = vsel %vm334, %v331, %v333
        %339 = vst [vmem:[#allocation2 + $0x20] sm:$0xff] %v335
        %340 = vst [vmem:[#allocation2 + $0x28] sm:$0xff] %v336
        %341 = vrot.lane.b32.xlu0 %v301, 125
        %v342 = vpop.permute.xlu0 %341
        %343 = vrot.lane.b32.xlu0 %v303, 125
        %v344 = vpop.permute.xlu0 %343
        %345 = vrot.lane.b32.xlu0 %v302, 125
        %v346 = vpop.permute.xlu0 %345
        %347 = vrot.lane.b32.xlu0 %v304, 125
        %v348 = vpop.permute.xlu0 %347
        %vm349 = vcmask 1022976
        %v350 = vsel %vm349, %v342, %v344
        %v351 = vsel %vm349, %v346, %v348
        %354 = vst [vmem:[#allocation2 + $0x30] sm:$0xff] %v350
        %355 = vst [vmem:[#allocation2 + $0x38] sm:$0xff] %v351
        %356 = vrot.lane.b32.xlu0 %v301, 124
        %v357 = vpop.permute.xlu0 %356
        %358 = vrot.lane.b32.xlu0 %v303, 124
        %v359 = vpop.permute.xlu0 %358
        %360 = vrot.lane.b32.xlu0 %v302, 124
        %v361 = vpop.permute.xlu0 %360
        %362 = vrot.lane.b32.xlu0 %v304, 124
        %v363 = vpop.permute.xlu0 %362
        %vm364 = vcmask 1014784
        %v365 = vsel %vm364, %v357, %v359
        %v366 = vsel %vm364, %v361, %v363
        %369 = vst [vmem:[#allocation2 + $0x40] sm:$0xff] %v365
        %370 = vst [vmem:[#allocation2 + $0x48] sm:$0xff] %v366
        %371 = vrot.lane.b32.xlu0 %v301, 123
        %v372 = vpop.permute.xlu0 %371
        %373 = vrot.lane.b32.xlu0 %v303, 123
        %v374 = vpop.permute.xlu0 %373
        %375 = vrot.lane.b32.xlu0 %v302, 123
        %v376 = vpop.permute.xlu0 %375
        %377 = vrot.lane.b32.xlu0 %v304, 123
        %v378 = vpop.permute.xlu0 %377
        %vm379 = vcmask 1006592
        %v380 = vsel %vm379, %v372, %v374
        %v381 = vsel %vm379, %v376, %v378
        %384 = vst [vmem:[#allocation2 + $0x50] sm:$0xff] %v380
        %385 = vst [vmem:[#allocation2 + $0x58] sm:$0xff] %v381
        %386 = vrot.lane.b32.xlu0 %v301, 122
        %v387 = vpop.permute.xlu0 %386
        %388 = vrot.lane.b32.xlu0 %v303, 122
        %v389 = vpop.permute.xlu0 %388
        %390 = vrot.lane.b32.xlu0 %v302, 122
        %v391 = vpop.permute.xlu0 %390
        %392 = vrot.lane.b32.xlu0 %v304, 122
        %v393 = vpop.permute.xlu0 %392
        %vm394 = vcmask 998400
        %v395 = vsel %vm394, %v387, %v389
        %v396 = vsel %vm394, %v391, %v393
        %399 = vst [vmem:[#allocation2 + $0x60] sm:$0xff] %v395
        %400 = vst [vmem:[#allocation2 + $0x68] sm:$0xff] %v396
        %401 = vrot.lane.b32.xlu0 %v301, 121
        %v402 = vpop.permute.xlu0 %401
        %403 = vrot.lane.b32.xlu0 %v303, 121
        %v404 = vpop.permute.xlu0 %403
        %405 = vrot.lane.b32.xlu0 %v302, 121
        %v406 = vpop.permute.xlu0 %405
        %407 = vrot.lane.b32.xlu0 %v304, 121
        %v408 = vpop.permute.xlu0 %407
        %vm409 = vcmask 990208
        %v410 = vsel %vm409, %v402, %v404
        %v411 = vsel %vm409, %v406, %v408
        %414 = vst [vmem:[#allocation2 + $0x70] sm:$0xff] %v410
        %415 = vst [vmem:[#allocation2 + $0x78] sm:$0xff] %v411
        %416 = vrot.lane.b32.xlu0 %v301, 120
        %v417 = vpop.permute.xlu0 %416
        %418 = vrot.lane.b32.xlu0 %v303, 120
        %v419 = vpop.permute.xlu0 %418
        %420 = vrot.lane.b32.xlu0 %v302, 120
        %v421 = vpop.permute.xlu0 %420
        %422 = vrot.lane.b32.xlu0 %v304, 120
        %v423 = vpop.permute.xlu0 %422
        %vm424 = vcmask 982016
        %v425 = vsel %vm424, %v417, %v419
        %v426 = vsel %vm424, %v421, %v423
        %429 = vst [vmem:[#allocation2 + $0x80] sm:$0xff] %v425
        %430 = vst [vmem:[#allocation2 + $0x88] sm:$0xff] %v426
        %431 = vrot.lane.b32.xlu0 %v301, 119
        %v432 = vpop.permute.xlu0 %431
        %433 = vrot.lane.b32.xlu0 %v303, 119
        %v434 = vpop.permute.xlu0 %433
        %435 = vrot.lane.b32.xlu0 %v302, 119
        %v436 = vpop.permute.xlu0 %435
        %437 = vrot.lane.b32.xlu0 %v304, 119
        %v438 = vpop.permute.xlu0 %437
        %vm439 = vcmask 973824
        %v440 = vsel %vm439, %v432, %v434
        %v441 = vsel %vm439, %v436, %v438
        %444 = vst [vmem:[#allocation2 + $0x90] sm:$0xff] %v440
        %445 = vst [vmem:[#allocation2 + $0x98] sm:$0xff] %v441
        %446 = vrot.lane.b32.xlu0 %v301, 118
        %v447 = vpop.permute.xlu0 %446
        %448 = vrot.lane.b32.xlu0 %v303, 118
        %v449 = vpop.permute.xlu0 %448
        %450 = vrot.lane.b32.xlu0 %v302, 118
        %v451 = vpop.permute.xlu0 %450
        %452 = vrot.lane.b32.xlu0 %v304, 118
        %v453 = vpop.permute.xlu0 %452
        %vm454 = vcmask 965632
        %v455 = vsel %vm454, %v447, %v449
        %v456 = vsel %vm454, %v451, %v453
        %459 = vst [vmem:[#allocation2 + $0xa0] sm:$0xff] %v455
        %460 = vst [vmem:[#allocation2 + $0xa8] sm:$0xff] %v456
        %461 = vrot.lane.b32.xlu0 %v301, 117
        %v462 = vpop.permute.xlu0 %461
        %463 = vrot.lane.b32.xlu0 %v303, 117
        %v464 = vpop.permute.xlu0 %463
        %465 = vrot.lane.b32.xlu0 %v302, 117
        %v466 = vpop.permute.xlu0 %465
        %467 = vrot.lane.b32.xlu0 %v304, 117
        %v468 = vpop.permute.xlu0 %467
        %vm469 = vcmask 957440
        %v470 = vsel %vm469, %v462, %v464
        %v471 = vsel %vm469, %v466, %v468
        %474 = vst [vmem:[#allocation2 + $0xb0] sm:$0xff] %v470
        %475 = vst [vmem:[#allocation2 + $0xb8] sm:$0xff] %v471
        %476 = vrot.lane.b32.xlu0 %v301, 116
        %v477 = vpop.permute.xlu0 %476
        %478 = vrot.lane.b32.xlu0 %v303, 116
        %v479 = vpop.permute.xlu0 %478
        %480 = vrot.lane.b32.xlu0 %v302, 116
        %v481 = vpop.permute.xlu0 %480
        %482 = vrot.lane.b32.xlu0 %v304, 116
        %v483 = vpop.permute.xlu0 %482
        %vm484 = vcmask 949248
        %v485 = vsel %vm484, %v477, %v479
        %v486 = vsel %vm484, %v481, %v483
        %489 = vst [vmem:[#allocation2 + $0xc0] sm:$0xff] %v485
        %490 = vst [vmem:[#allocation2 + $0xc8] sm:$0xff] %v486
        %491 = vrot.lane.b32.xlu0 %v301, 115
        %v492 = vpop.permute.xlu0 %491
        %493 = vrot.lane.b32.xlu0 %v303, 115
        %v494 = vpop.permute.xlu0 %493
        %495 = vrot.lane.b32.xlu0 %v302, 115
        %v496 = vpop.permute.xlu0 %495
        %497 = vrot.lane.b32.xlu0 %v304, 115
        %v498 = vpop.permute.xlu0 %497
        %vm499 = vcmask 941056
        %v500 = vsel %vm499, %v492, %v494
        %v501 = vsel %vm499, %v496, %v498
        %504 = vst [vmem:[#allocation2 + $0xd0] sm:$0xff] %v500
        %505 = vst [vmem:[#allocation2 + $0xd8] sm:$0xff] %v501
        %506 = vrot.lane.b32.xlu0 %v301, 114
        %v507 = vpop.permute.xlu0 %506
        %508 = vrot.lane.b32.xlu0 %v303, 114
        %v509 = vpop.permute.xlu0 %508
        %510 = vrot.lane.b32.xlu0 %v302, 114
        %v511 = vpop.permute.xlu0 %510
        %512 = vrot.lane.b32.xlu0 %v304, 114
        %v513 = vpop.permute.xlu0 %512
        %vm514 = vcmask 932864
        %v515 = vsel %vm514, %v507, %v509
        %v516 = vsel %vm514, %v511, %v513
        %519 = vst [vmem:[#allocation2 + $0xe0] sm:$0xff] %v515
        %520 = vst [vmem:[#allocation2 + $0xe8] sm:$0xff] %v516
        %521 = vrot.lane.b32.xlu0 %v301, 113
        %v522 = vpop.permute.xlu0 %521
        %523 = vrot.lane.b32.xlu0 %v303, 113
        %v524 = vpop.permute.xlu0 %523
        %525 = vrot.lane.b32.xlu0 %v302, 113
        %v526 = vpop.permute.xlu0 %525
        %527 = vrot.lane.b32.xlu0 %v304, 113
        %v528 = vpop.permute.xlu0 %527
        %vm529 = vcmask 924672
        %v530 = vsel %vm529, %v522, %v524
        %v531 = vsel %vm529, %v526, %v528
        %534 = vst [vmem:[#allocation2 + $0xf0] sm:$0xff] %v530
        %535 = vst [vmem:[#allocation2 + $0xf8] sm:$0xff] %v531
        %v536 = vld [vmem:[%s2] sm:$0xff]
        %v537 = vld [vmem:[%s2 + $0x8] sm:$0xff]
        %v538 = vld [vmem:[%s2 + $0x10] sm:$0xff]
        %v539 = vld [vmem:[%s2 + $0x18] sm:$0xff]
        %v540 = vld [vmem:[%s2 + $0x20] sm:$0xff]
        %v541 = vld [vmem:[%s2 + $0x28] sm:$0xff]
        %v542 = vld [vmem:[%s2 + $0x30] sm:$0xff]
        %v543 = vld [vmem:[%s2 + $0x38] sm:$0xff]
        %v544 = vld [vmem:[%s2 + $0x40] sm:$0xff]
        %v545 = vld [vmem:[%s2 + $0x48] sm:$0xff]
        %v546 = vld [vmem:[%s2 + $0x50] sm:$0xff]
        %v547 = vld [vmem:[%s2 + $0x58] sm:$0xff]
        %v548 = vld [vmem:[%s2 + $0x60] sm:$0xff]
        %v549 = vld [vmem:[%s2 + $0x68] sm:$0xff]
        %v550 = vld [vmem:[%s2 + $0x70] sm:$0xff]
        %v551 = vld [vmem:[%s2 + $0x78] sm:$0xff]
        %v552 = vld [vmem:[%s2 + $0x80] sm:$0xff]
        %v553 = vld [vmem:[%s2 + $0x88] sm:$0xff]
        %v554 = vld [vmem:[%s2 + $0x90] sm:$0xff]
        %v555 = vld [vmem:[%s2 + $0x98] sm:$0xff]
        %v556 = vld [vmem:[%s2 + $0xa0] sm:$0xff]
        %v557 = vld [vmem:[%s2 + $0xa8] sm:$0xff]
        %v558 = vld [vmem:[%s2 + $0xb0] sm:$0xff]
        %v559 = vld [vmem:[%s2 + $0xb8] sm:$0xff]
        %v560 = vld [vmem:[%s2 + $0xc0] sm:$0xff]
        %v561 = vld [vmem:[%s2 + $0xc8] sm:$0xff]
        %v562 = vld [vmem:[%s2 + $0xd0] sm:$0xff]
        %v563 = vld [vmem:[%s2 + $0xd8] sm:$0xff]
        %v564 = vld [vmem:[%s2 + $0xe0] sm:$0xff]
        %v565 = vld [vmem:[%s2 + $0xe8] sm:$0xff]
        %v566 = vld [vmem:[%s2 + $0xf0] sm:$0xff]
        %v567 = vld [vmem:[%s2 + $0xf8] sm:$0xff]
        %v568 = vld [vmem:[%s2 + $0x100] sm:$0xff]
        %v569 = vld [vmem:[%s2 + $0x108] sm:$0xff]
        %v570 = vld [vmem:[%s2 + $0x110] sm:$0xff]
        %v571 = vld [vmem:[%s2 + $0x118] sm:$0xff]
        %v572 = vld [vmem:[%s2 + $0x120] sm:$0xff]
        %v573 = vld [vmem:[%s2 + $0x128] sm:$0xff]
        %v574 = vld [vmem:[%s2 + $0x130] sm:$0xff]
        %v575 = vld [vmem:[%s2 + $0x138] sm:$0xff]
        %v576 = vld [vmem:[%s2 + $0x140] sm:$0xff]
        %v577 = vld [vmem:[%s2 + $0x148] sm:$0xff]
        %v578 = vld [vmem:[%s2 + $0x150] sm:$0xff]
        %v579 = vld [vmem:[%s2 + $0x158] sm:$0xff]
        %v580 = vld [vmem:[%s2 + $0x160] sm:$0xff]
        %v581 = vld [vmem:[%s2 + $0x168] sm:$0xff]
        %v582 = vld [vmem:[%s2 + $0x170] sm:$0xff]
        %v583 = vld [vmem:[%s2 + $0x178] sm:$0xff]
        %v584 = vld [vmem:[%s2 + $0x180] sm:$0xff]
        %v585 = vld [vmem:[%s2 + $0x188] sm:$0xff]
        %v586 = vld [vmem:[%s2 + $0x190] sm:$0xff]
        %v587 = vld [vmem:[%s2 + $0x198] sm:$0xff]
        %v588 = vld [vmem:[%s2 + $0x1a0] sm:$0xff]
        %v589 = vld [vmem:[%s2 + $0x1a8] sm:$0xff]
        %v590 = vld [vmem:[%s2 + $0x1b0] sm:$0xff]
        %v591 = vld [vmem:[%s2 + $0x1b8] sm:$0xff]
        %v592 = vld [vmem:[%s2 + $0x1c0] sm:$0xff]
        %v593 = vld [vmem:[%s2 + $0x1c8] sm:$0xff]
        %v594 = vld [vmem:[%s2 + $0x1d0] sm:$0xff]
        %v595 = vld [vmem:[%s2 + $0x1d8] sm:$0xff]
        %v596 = vld [vmem:[%s2 + $0x1e0] sm:$0xff]
        %v597 = vld [vmem:[%s2 + $0x1e8] sm:$0xff]
        %v598 = vld [vmem:[%s2 + $0x1f0] sm:$0xff]
        %v599 = vld [vmem:[%s2 + $0x1f8] sm:$0xff]
        %v600 = vld [vmem:[#allocation2] sm:$0xff]
        %v601 = vld [vmem:[#allocation2 + $0x8] sm:$0xff]
        %v602 = vld [vmem:[#allocation2 + $0x10] sm:$0xff]
        %v603 = vld [vmem:[#allocation2 + $0x18] sm:$0xff]
        %v604 = vld [vmem:[#allocation2 + $0x20] sm:$0xff]
        %v605 = vld [vmem:[#allocation2 + $0x28] sm:$0xff]
        %v606 = vld [vmem:[#allocation2 + $0x30] sm:$0xff]
        %v607 = vld [vmem:[#allocation2 + $0x38] sm:$0xff]
        %v608 = vld [vmem:[#allocation2 + $0x40] sm:$0xff]
        %v609 = vld [vmem:[#allocation2 + $0x48] sm:$0xff]
        %v610 = vld [vmem:[#allocation2 + $0x50] sm:$0xff]
        %v611 = vld [vmem:[#allocation2 + $0x58] sm:$0xff]
        %v612 = vld [vmem:[#allocation2 + $0x60] sm:$0xff]
        %v613 = vld [vmem:[#allocation2 + $0x68] sm:$0xff]
        %v614 = vld [vmem:[#allocation2 + $0x70] sm:$0xff]
        %v615 = vld [vmem:[#allocation2 + $0x78] sm:$0xff]
        %v616 = vld [vmem:[#allocation2 + $0x80] sm:$0xff]
        %v617 = vld [vmem:[#allocation2 + $0x88] sm:$0xff]
        %v618 = vld [vmem:[#allocation2 + $0x90] sm:$0xff]
        %v619 = vld [vmem:[#allocation2 + $0x98] sm:$0xff]
        %v620 = vld [vmem:[#allocation2 + $0xa0] sm:$0xff]
        %v621 = vld [vmem:[#allocation2 + $0xa8] sm:$0xff]
        %v622 = vld [vmem:[#allocation2 + $0xb0] sm:$0xff]
        %v623 = vld [vmem:[#allocation2 + $0xb8] sm:$0xff]
        %v624 = vld [vmem:[#allocation2 + $0xc0] sm:$0xff]
        %v625 = vld [vmem:[#allocation2 + $0xc8] sm:$0xff]
        %v626 = vld [vmem:[#allocation2 + $0xd0] sm:$0xff]
        %v627 = vld [vmem:[#allocation2 + $0xd8] sm:$0xff]
        %v628 = vld [vmem:[#allocation2 + $0xe0] sm:$0xff]
        %v629 = vld [vmem:[#allocation2 + $0xe8] sm:$0xff]
        %v630 = vld [vmem:[#allocation2 + $0xf0] sm:$0xff]
        %v631 = vld [vmem:[#allocation2 + $0xf8] sm:$0xff]
        %632 = vmatpush.msra.mxu0 %v615
        %633 = vmatpush.msra.mxu0 %v614
        %634 = vmatpush.msra.mxu0 %v613
        %635 = vmatpush.msra.mxu0 %v612
        %636 = vmatpush.msra.mxu0 %v611
        %637 = vmatpush.msra.mxu0 %v610
        %638 = vmatpush.msra.mxu0 %v609
        %639 = vmatpush.msra.mxu0 %v608
        %640 = vmatpush.msra.mxu0 %v607
        %641 = vmatpush.msra.mxu0 %v606
        %642 = vmatpush.msra.mxu0 %v605
        %643 = vmatpush.msra.mxu0 %v604
        %644 = vmatpush.msra.mxu0 %v603
        %645 = vmatpush.msra.mxu0 %v602
        %646 = vmatpush.msra.mxu0 %v601
        %647 = vmatpush.msra.mxu0 %v600
        %648 = vmatmul.f32.gmra.mxu0 %v536
        %v649 = vpop.f32.mrf.mxu0
        %v650 = vadd.f32 0.0, %v649
        %651 = vmatmul.f32.gmra.mxu0 %v538
        %v652 = vpop.f32.mrf.mxu0
        %v653 = vadd.f32 0.0, %v652
        %654 = vmatmul.f32.gmra.mxu0 %v540
        %v655 = vpop.f32.mrf.mxu0
        %v656 = vadd.f32 0.0, %v655
        %657 = vmatmul.f32.gmra.mxu0 %v542
        %v658 = vpop.f32.mrf.mxu0
        %v659 = vadd.f32 0.0, %v658
        %660 = vmatmul.f32.gmra.mxu0 %v544
        %v661 = vpop.f32.mrf.mxu0
        %v662 = vadd.f32 0.0, %v661
        %663 = vmatmul.f32.gmra.mxu0 %v546
        %v664 = vpop.f32.mrf.mxu0
        %v665 = vadd.f32 0.0, %v664
        %666 = vmatmul.f32.gmra.mxu0 %v548
        %v667 = vpop.f32.mrf.mxu0
        %v668 = vadd.f32 0.0, %v667
        %669 = vmatmul.f32.gmra.mxu0 %v550
        %v670 = vpop.f32.mrf.mxu0
        %v671 = vadd.f32 0.0, %v670
        %672 = vmatmul.f32.gmra.mxu0 %v552
        %v673 = vpop.f32.mrf.mxu0
        %v674 = vadd.f32 0.0, %v673
        %675 = vmatmul.f32.gmra.mxu0 %v554
        %v676 = vpop.f32.mrf.mxu0
        %v677 = vadd.f32 0.0, %v676
        %678 = vmatmul.f32.gmra.mxu0 %v556
        %v679 = vpop.f32.mrf.mxu0
        %v680 = vadd.f32 0.0, %v679
        %681 = vmatmul.f32.gmra.mxu0 %v558
        %v682 = vpop.f32.mrf.mxu0
        %v683 = vadd.f32 0.0, %v682
        %684 = vmatmul.f32.gmra.mxu0 %v560
        %v685 = vpop.f32.mrf.mxu0
        %v686 = vadd.f32 0.0, %v685
        %687 = vmatmul.f32.gmra.mxu0 %v562
        %v688 = vpop.f32.mrf.mxu0
        %v689 = vadd.f32 0.0, %v688
        %690 = vmatmul.f32.gmra.mxu0 %v564
        %v691 = vpop.f32.mrf.mxu0
        %v692 = vadd.f32 0.0, %v691
        %693 = vmatmul.f32.gmra.mxu0 %v566
        %v694 = vpop.f32.mrf.mxu0
        %v695 = vadd.f32 0.0, %v694
        %696 = vmatmul.f32.gmra.mxu0 %v568
        %v697 = vpop.f32.mrf.mxu0
        %v698 = vadd.f32 0.0, %v697
        %699 = vmatmul.f32.gmra.mxu0 %v570
        %v700 = vpop.f32.mrf.mxu0
        %v701 = vadd.f32 0.0, %v700
        %702 = vmatmul.f32.gmra.mxu0 %v572
        %v703 = vpop.f32.mrf.mxu0
        %v704 = vadd.f32 0.0, %v703
        %705 = vmatmul.f32.gmra.mxu0 %v574
        %v706 = vpop.f32.mrf.mxu0
        %v707 = vadd.f32 0.0, %v706
        %708 = vmatmul.f32.gmra.mxu0 %v576
        %v709 = vpop.f32.mrf.mxu0
        %v710 = vadd.f32 0.0, %v709
        %711 = vmatmul.f32.gmra.mxu0 %v578
        %v712 = vpop.f32.mrf.mxu0
        %v713 = vadd.f32 0.0, %v712
        %714 = vmatmul.f32.gmra.mxu0 %v580
        %v715 = vpop.f32.mrf.mxu0
        %v716 = vadd.f32 0.0, %v715
        %717 = vmatmul.f32.gmra.mxu0 %v582
        %v718 = vpop.f32.mrf.mxu0
        %v719 = vadd.f32 0.0, %v718
        %720 = vmatmul.f32.gmra.mxu0 %v584
        %v721 = vpop.f32.mrf.mxu0
        %v722 = vadd.f32 0.0, %v721
        %723 = vmatmul.f32.gmra.mxu0 %v586
        %v724 = vpop.f32.mrf.mxu0
        %v725 = vadd.f32 0.0, %v724
        %726 = vmatmul.f32.gmra.mxu0 %v588
        %v727 = vpop.f32.mrf.mxu0
        %v728 = vadd.f32 0.0, %v727
        %729 = vmatmul.f32.gmra.mxu0 %v590
        %v730 = vpop.f32.mrf.mxu0
        %v731 = vadd.f32 0.0, %v730
        %732 = vmatmul.f32.gmra.mxu0 %v592
        %v733 = vpop.f32.mrf.mxu0
        %v734 = vadd.f32 0.0, %v733
        %735 = vmatmul.f32.gmra.mxu0 %v594
        %v736 = vpop.f32.mrf.mxu0
        %v737 = vadd.f32 0.0, %v736
        %738 = vmatmul.f32.gmra.mxu0 %v596
        %v739 = vpop.f32.mrf.mxu0
        %v740 = vadd.f32 0.0, %v739
        %741 = vmatmul.f32.gmra.mxu0 %v598
        %v742 = vpop.f32.mrf.mxu0
        %v743 = vadd.f32 0.0, %v742
        %744 = vdwg.mxu0
        %745 = vmatpush.msra.mxu0 %v631
        %746 = vmatpush.msra.mxu0 %v630
        %747 = vmatpush.msra.mxu0 %v629
        %748 = vmatpush.msra.mxu0 %v628
        %749 = vmatpush.msra.mxu0 %v627
        %750 = vmatpush.msra.mxu0 %v626
        %751 = vmatpush.msra.mxu0 %v625
        %752 = vmatpush.msra.mxu0 %v624
        %753 = vmatpush.msra.mxu0 %v623
        %754 = vmatpush.msra.mxu0 %v622
        %755 = vmatpush.msra.mxu0 %v621
        %756 = vmatpush.msra.mxu0 %v620
        %757 = vmatpush.msra.mxu0 %v619
        %758 = vmatpush.msra.mxu0 %v618
        %759 = vmatpush.msra.mxu0 %v617
        %760 = vmatpush.msra.mxu0 %v616
        %761 = vmatmul.f32.gmra.mxu0 %v537
        %v762 = vpop.f32.mrf.mxu0
        %v763 = vadd.f32 %v650, %v762
        %764 = vmatmul.f32.gmra.mxu0 %v539
        %v765 = vpop.f32.mrf.mxu0
        %v766 = vadd.f32 %v653, %v765
        %767 = vmatmul.f32.gmra.mxu0 %v541
        %v768 = vpop.f32.mrf.mxu0
        %v769 = vadd.f32 %v656, %v768
        %770 = vmatmul.f32.gmra.mxu0 %v543
        %v771 = vpop.f32.mrf.mxu0
        %v772 = vadd.f32 %v659, %v771
        %773 = vmatmul.f32.gmra.mxu0 %v545
        %v774 = vpop.f32.mrf.mxu0
        %v775 = vadd.f32 %v662, %v774
        %776 = vmatmul.f32.gmra.mxu0 %v547
        %v777 = vpop.f32.mrf.mxu0
        %v778 = vadd.f32 %v665, %v777
        %779 = vmatmul.f32.gmra.mxu0 %v549
        %v780 = vpop.f32.mrf.mxu0
        %v781 = vadd.f32 %v668, %v780
        %782 = vmatmul.f32.gmra.mxu0 %v551
        %v783 = vpop.f32.mrf.mxu0
        %v784 = vadd.f32 %v671, %v783
        %785 = vmatmul.f32.gmra.mxu0 %v553
        %v786 = vpop.f32.mrf.mxu0
        %v787 = vadd.f32 %v674, %v786
        %788 = vmatmul.f32.gmra.mxu0 %v555
        %v789 = vpop.f32.mrf.mxu0
        %v790 = vadd.f32 %v677, %v789
        %791 = vmatmul.f32.gmra.mxu0 %v557
        %v792 = vpop.f32.mrf.mxu0
        %v793 = vadd.f32 %v680, %v792
        %794 = vmatmul.f32.gmra.mxu0 %v559
        %v795 = vpop.f32.mrf.mxu0
        %v796 = vadd.f32 %v683, %v795
        %797 = vmatmul.f32.gmra.mxu0 %v561
        %v798 = vpop.f32.mrf.mxu0
        %v799 = vadd.f32 %v686, %v798
        %800 = vmatmul.f32.gmra.mxu0 %v563
        %v801 = vpop.f32.mrf.mxu0
        %v802 = vadd.f32 %v689, %v801
        %803 = vmatmul.f32.gmra.mxu0 %v565
        %v804 = vpop.f32.mrf.mxu0
        %v805 = vadd.f32 %v692, %v804
        %806 = vmatmul.f32.gmra.mxu0 %v567
        %v807 = vpop.f32.mrf.mxu0
        %v808 = vadd.f32 %v695, %v807
        %809 = vmatmul.f32.gmra.mxu0 %v569
        %v810 = vpop.f32.mrf.mxu0
        %v811 = vadd.f32 %v698, %v810
        %812 = vmatmul.f32.gmra.mxu0 %v571
        %v813 = vpop.f32.mrf.mxu0
        %v814 = vadd.f32 %v701, %v813
        %815 = vmatmul.f32.gmra.mxu0 %v573
        %v816 = vpop.f32.mrf.mxu0
        %v817 = vadd.f32 %v704, %v816
        %818 = vmatmul.f32.gmra.mxu0 %v575
        %v819 = vpop.f32.mrf.mxu0
        %v820 = vadd.f32 %v707, %v819
        %821 = vmatmul.f32.gmra.mxu0 %v577
        %v822 = vpop.f32.mrf.mxu0
        %v823 = vadd.f32 %v710, %v822
        %824 = vmatmul.f32.gmra.mxu0 %v579
        %v825 = vpop.f32.mrf.mxu0
        %v826 = vadd.f32 %v713, %v825
        %827 = vmatmul.f32.gmra.mxu0 %v581
        %v828 = vpop.f32.mrf.mxu0
        %v829 = vadd.f32 %v716, %v828
        %830 = vmatmul.f32.gmra.mxu0 %v583
        %v831 = vpop.f32.mrf.mxu0
        %v832 = vadd.f32 %v719, %v831
        %833 = vmatmul.f32.gmra.mxu0 %v585
        %v834 = vpop.f32.mrf.mxu0
        %v835 = vadd.f32 %v722, %v834
        %836 = vmatmul.f32.gmra.mxu0 %v587
        %v837 = vpop.f32.mrf.mxu0
        %v838 = vadd.f32 %v725, %v837
        %839 = vmatmul.f32.gmra.mxu0 %v589
        %v840 = vpop.f32.mrf.mxu0
        %v841 = vadd.f32 %v728, %v840
        %842 = vmatmul.f32.gmra.mxu0 %v591
        %v843 = vpop.f32.mrf.mxu0
        %v844 = vadd.f32 %v731, %v843
        %845 = vmatmul.f32.gmra.mxu0 %v593
        %v846 = vpop.f32.mrf.mxu0
        %v847 = vadd.f32 %v734, %v846
        %848 = vmatmul.f32.gmra.mxu0 %v595
        %v849 = vpop.f32.mrf.mxu0
        %v850 = vadd.f32 %v737, %v849
        %851 = vmatmul.f32.gmra.mxu0 %v597
        %v852 = vpop.f32.mrf.mxu0
        %v853 = vadd.f32 %v740, %v852
        %854 = vmatmul.f32.gmra.mxu0 %v599
        %v855 = vpop.f32.mrf.mxu0
        %v856 = vadd.f32 %v743, %v855
        %857 = vdwg.mxu0
        %v858 = vlaneseq
        %v859 = vshrl.u32 %v858, 7
        %v860 = vadd.s32 %v859, 8
        %v861 = vadd.s32 %v859, 16
        %v862 = vadd.s32 %v859, 24
        %v863 = vadd.s32 %v859, 32
        %v864 = vadd.s32 %v859, 40
        %v865 = vadd.s32 %v859, 48
        %v866 = vadd.s32 %v859, 56
        %v867 = vadd.s32 %v859, 64
        %v868 = vadd.s32 %v859, 72
        %v869 = vadd.s32 %v859, 80
        %v870 = vadd.s32 %v859, 88
        %v871 = vadd.s32 %v859, 96
        %v872 = vadd.s32 %v859, 104
        %v873 = vadd.s32 %v859, 112
        %v874 = vadd.s32 %v859, 120
        %vm875 = vcmp.eq.s32.totalorder %v859, 0
        %vm876 = vcmp.eq.s32.totalorder %v860, 0
        %vm877 = vcmp.eq.s32.totalorder %v861, 0
        %vm878 = vcmp.eq.s32.totalorder %v862, 0
        %vm879 = vcmp.eq.s32.totalorder %v863, 0
        %vm880 = vcmp.eq.s32.totalorder %v864, 0
        %vm881 = vcmp.eq.s32.totalorder %v865, 0
        %vm882 = vcmp.eq.s32.totalorder %v866, 0
        %vm883 = vcmp.eq.s32.totalorder %v867, 0
        %vm884 = vcmp.eq.s32.totalorder %v868, 0
        %vm885 = vcmp.eq.s32.totalorder %v869, 0
        %vm886 = vcmp.eq.s32.totalorder %v870, 0
        %vm887 = vcmp.eq.s32.totalorder %v871, 0
        %vm888 = vcmp.eq.s32.totalorder %v872, 0
        %vm889 = vcmp.eq.s32.totalorder %v873, 0
        %vm890 = vcmp.eq.s32.totalorder %v874, 0
        %v891 = vmul.f32 %v811, %v811
        %v892 = vmul.f32 %v814, %v814
        %v893 = vmul.f32 %v817, %v817
        %v894 = vmul.f32 %v820, %v820
        %v895 = vmul.f32 %v823, %v823
        %v896 = vmul.f32 %v826, %v826
        %v897 = vmul.f32 %v829, %v829
        %v898 = vmul.f32 %v832, %v832
        %v899 = vmul.f32 %v835, %v835
        %v900 = vmul.f32 %v838, %v838
        %v901 = vmul.f32 %v841, %v841
        %v902 = vmul.f32 %v844, %v844
        %v903 = vmul.f32 %v847, %v847
        %v904 = vmul.f32 %v850, %v850
        %v905 = vmul.f32 %v853, %v853
        %v906 = vmul.f32 %v856, %v856
        %v907 = vsel %vm875, 0.0, %v891
        %v908 = vsel %vm876, 0.0, %v892
        %v909 = vsel %vm877, 0.0, %v893
        %v910 = vsel %vm878, 0.0, %v894
        %v911 = vsel %vm879, 0.0, %v895
        %v912 = vsel %vm880, 0.0, %v896
        %v913 = vsel %vm881, 0.0, %v897
        %v914 = vsel %vm882, 0.0, %v898
        %v915 = vsel %vm883, 0.0, %v899
        %v916 = vsel %vm884, 0.0, %v900
        %v917 = vsel %vm885, 0.0, %v901
        %v918 = vsel %vm886, 0.0, %v902
        %v919 = vsel %vm887, 0.0, %v903
        %v920 = vsel %vm888, 0.0, %v904
        %v921 = vsel %vm889, 0.0, %v905
        %v922 = vsel %vm890, 0.0, %v906
        %v923 = vmul.f32 %v763, %v763
        %v924 = vmul.f32 %v766, %v766
        %v925 = vmul.f32 %v769, %v769
        %v926 = vmul.f32 %v772, %v772
        %v927 = vmul.f32 %v775, %v775
        %v928 = vmul.f32 %v778, %v778
        %v929 = vmul.f32 %v781, %v781
        %v930 = vmul.f32 %v784, %v784
        %v931 = vmul.f32 %v787, %v787
        %v932 = vmul.f32 %v790, %v790
        %v933 = vmul.f32 %v793, %v793
        %v934 = vmul.f32 %v796, %v796
        %v935 = vmul.f32 %v799, %v799
        %v936 = vmul.f32 %v802, %v802
        %v937 = vmul.f32 %v805, %v805
        %v938 = vmul.f32 %v808, %v808
        %v939 = vadd.f32 %v923, %v907
        %v940 = vadd.f32 %v924, %v908
        %v941 = vadd.f32 %v925, %v909
        %v942 = vadd.f32 %v926, %v910
        %v943 = vadd.f32 %v927, %v911
        %v944 = vadd.f32 %v928, %v912
        %v945 = vadd.f32 %v929, %v913
        %v946 = vadd.f32 %v930, %v914
        %v947 = vadd.f32 %v931, %v915
        %v948 = vadd.f32 %v932, %v916
        %v949 = vadd.f32 %v933, %v917
        %v950 = vadd.f32 %v934, %v918
        %v951 = vadd.f32 %v935, %v919
        %v952 = vadd.f32 %v936, %v920
        %v953 = vadd.f32 %v937, %v921
        %v954 = vadd.f32 %v938, %v922
        %v955 = vrsqrt.pop %v939
        %v956 = vmul.f32 %v955, %v939
        %v957 = vmul.f32 %v956, %v955
        %v958 = vmul.f32 0.5, %v957
        %v959 = vsub.f32 1.5, %v958
        %v960 = vmul.f32 %v955, %v959
        %v961 = vmul.f32 %v939, %v960
        %vm962 = vcmp.eq.f32.partialorder %v939, inf
        %v963 = vsel %vm962, %v939, %v961
        %vm964 = vcmp.eq.f32.partialorder %v939, 0.0
        %v965 = vand.u32 %v939, 2147483648
        %v966 = vsel %vm964, %v965, %v963
        %v967 = vrsqrt.pop %v940
        %v968 = vmul.f32 %v967, %v940
        %v969 = vmul.f32 %v968, %v967
        %v970 = vmul.f32 0.5, %v969
        %v971 = vsub.f32 1.5, %v970
        %v972 = vmul.f32 %v967, %v971
        %v973 = vmul.f32 %v940, %v972
        %vm974 = vcmp.eq.f32.partialorder %v940, inf
        %v975 = vsel %vm974, %v940, %v973
        %vm976 = vcmp.eq.f32.partialorder %v940, 0.0
        %v977 = vand.u32 %v940, 2147483648
        %v978 = vsel %vm976, %v977, %v975
        %v979 = vrsqrt.pop %v941
        %v980 = vmul.f32 %v979, %v941
        %v981 = vmul.f32 %v980, %v979
        %v982 = vmul.f32 0.5, %v981
        %v983 = vsub.f32 1.5, %v982
        %v984 = vmul.f32 %v979, %v983
        %v985 = vmul.f32 %v941, %v984
        %vm986 = vcmp.eq.f32.partialorder %v941, inf
        %v987 = vsel %vm986, %v941, %v985
        %vm988 = vcmp.eq.f32.partialorder %v941, 0.0
        %v989 = vand.u32 %v941, 2147483648
        %v990 = vsel %vm988, %v989, %v987
        %v991 = vrsqrt.pop %v942
        %v992 = vmul.f32 %v991, %v942
        %v993 = vmul.f32 %v992, %v991
        %v994 = vmul.f32 0.5, %v993
        %v995 = vsub.f32 1.5, %v994
        %v996 = vmul.f32 %v991, %v995
        %v997 = vmul.f32 %v942, %v996
        %vm998 = vcmp.eq.f32.partialorder %v942, inf
        %v999 = vsel %vm998, %v942, %v997
        %vm1000 = vcmp.eq.f32.partialorder %v942, 0.0
        %v1001 = vand.u32 %v942, 2147483648
        %v1002 = vsel %vm1000, %v1001, %v999
        %v1003 = vrsqrt.pop %v943
        %v1004 = vmul.f32 %v1003, %v943
        %v1005 = vmul.f32 %v1004, %v1003
        %v1006 = vmul.f32 0.5, %v1005
        %v1007 = vsub.f32 1.5, %v1006
        %v1008 = vmul.f32 %v1003, %v1007
        %v1009 = vmul.f32 %v943, %v1008
        %vm1010 = vcmp.eq.f32.partialorder %v943, inf
        %v1011 = vsel %vm1010, %v943, %v1009
        %vm1012 = vcmp.eq.f32.partialorder %v943, 0.0
        %v1013 = vand.u32 %v943, 2147483648
        %v1014 = vsel %vm1012, %v1013, %v1011
        %v1015 = vrsqrt.pop %v944
        %v1016 = vmul.f32 %v1015, %v944
        %v1017 = vmul.f32 %v1016, %v1015
        %v1018 = vmul.f32 0.5, %v1017
        %v1019 = vsub.f32 1.5, %v1018
        %v1020 = vmul.f32 %v1015, %v1019
        %v1021 = vmul.f32 %v944, %v1020
        %vm1022 = vcmp.eq.f32.partialorder %v944, inf
        %v1023 = vsel %vm1022, %v944, %v1021
        %vm1024 = vcmp.eq.f32.partialorder %v944, 0.0
        %v1025 = vand.u32 %v944, 2147483648
        %v1026 = vsel %vm1024, %v1025, %v1023
        %v1027 = vrsqrt.pop %v945
        %v1028 = vmul.f32 %v1027, %v945
        %v1029 = vmul.f32 %v1028, %v1027
        %v1030 = vmul.f32 0.5, %v1029
        %v1031 = vsub.f32 1.5, %v1030
        %v1032 = vmul.f32 %v1027, %v1031
        %v1033 = vmul.f32 %v945, %v1032
        %vm1034 = vcmp.eq.f32.partialorder %v945, inf
        %v1035 = vsel %vm1034, %v945, %v1033
        %vm1036 = vcmp.eq.f32.partialorder %v945, 0.0
        %v1037 = vand.u32 %v945, 2147483648
        %v1038 = vsel %vm1036, %v1037, %v1035
        %v1039 = vrsqrt.pop %v946
        %v1040 = vmul.f32 %v1039, %v946
        %v1041 = vmul.f32 %v1040, %v1039
        %v1042 = vmul.f32 0.5, %v1041
        %v1043 = vsub.f32 1.5, %v1042
        %v1044 = vmul.f32 %v1039, %v1043
        %v1045 = vmul.f32 %v946, %v1044
        %vm1046 = vcmp.eq.f32.partialorder %v946, inf
        %v1047 = vsel %vm1046, %v946, %v1045
        %vm1048 = vcmp.eq.f32.partialorder %v946, 0.0
        %v1049 = vand.u32 %v946, 2147483648
        %v1050 = vsel %vm1048, %v1049, %v1047
        %v1051 = vrsqrt.pop %v947
        %v1052 = vmul.f32 %v1051, %v947
        %v1053 = vmul.f32 %v1052, %v1051
        %v1054 = vmul.f32 0.5, %v1053
        %v1055 = vsub.f32 1.5, %v1054
        %v1056 = vmul.f32 %v1051, %v1055
        %v1057 = vmul.f32 %v947, %v1056
        %vm1058 = vcmp.eq.f32.partialorder %v947, inf
        %v1059 = vsel %vm1058, %v947, %v1057
        %vm1060 = vcmp.eq.f32.partialorder %v947, 0.0
        %v1061 = vand.u32 %v947, 2147483648
        %v1062 = vsel %vm1060, %v1061, %v1059
        %v1063 = vrsqrt.pop %v948
        %v1064 = vmul.f32 %v1063, %v948
        %v1065 = vmul.f32 %v1064, %v1063
        %v1066 = vmul.f32 0.5, %v1065
        %v1067 = vsub.f32 1.5, %v1066
        %v1068 = vmul.f32 %v1063, %v1067
        %v1069 = vmul.f32 %v948, %v1068
        %vm1070 = vcmp.eq.f32.partialorder %v948, inf
        %v1071 = vsel %vm1070, %v948, %v1069
        %vm1072 = vcmp.eq.f32.partialorder %v948, 0.0
        %v1073 = vand.u32 %v948, 2147483648
        %v1074 = vsel %vm1072, %v1073, %v1071
        %v1075 = vrsqrt.pop %v949
        %v1076 = vmul.f32 %v1075, %v949
        %v1077 = vmul.f32 %v1076, %v1075
        %v1078 = vmul.f32 0.5, %v1077
        %v1079 = vsub.f32 1.5, %v1078
        %v1080 = vmul.f32 %v1075, %v1079
        %v1081 = vmul.f32 %v949, %v1080
        %vm1082 = vcmp.eq.f32.partialorder %v949, inf
        %v1083 = vsel %vm1082, %v949, %v1081
        %vm1084 = vcmp.eq.f32.partialorder %v949, 0.0
        %v1085 = vand.u32 %v949, 2147483648
        %v1086 = vsel %vm1084, %v1085, %v1083
        %v1087 = vrsqrt.pop %v950
        %v1088 = vmul.f32 %v1087, %v950
        %v1089 = vmul.f32 %v1088, %v1087
        %v1090 = vmul.f32 0.5, %v1089
        %v1091 = vsub.f32 1.5, %v1090
        %v1092 = vmul.f32 %v1087, %v1091
        %v1093 = vmul.f32 %v950, %v1092
        %vm1094 = vcmp.eq.f32.partialorder %v950, inf
        %v1095 = vsel %vm1094, %v950, %v1093
        %vm1096 = vcmp.eq.f32.partialorder %v950, 0.0
        %v1097 = vand.u32 %v950, 2147483648
        %v1098 = vsel %vm1096, %v1097, %v1095
        %v1099 = vrsqrt.pop %v951
        %v1100 = vmul.f32 %v1099, %v951
        %v1101 = vmul.f32 %v1100, %v1099
        %v1102 = vmul.f32 0.5, %v1101
        %v1103 = vsub.f32 1.5, %v1102
        %v1104 = vmul.f32 %v1099, %v1103
        %v1105 = vmul.f32 %v951, %v1104
        %vm1106 = vcmp.eq.f32.partialorder %v951, inf
        %v1107 = vsel %vm1106, %v951, %v1105
        %vm1108 = vcmp.eq.f32.partialorder %v951, 0.0
        %v1109 = vand.u32 %v951, 2147483648
        %v1110 = vsel %vm1108, %v1109, %v1107
        %v1111 = vrsqrt.pop %v952
        %v1112 = vmul.f32 %v1111, %v952
        %v1113 = vmul.f32 %v1112, %v1111
        %v1114 = vmul.f32 0.5, %v1113
        %v1115 = vsub.f32 1.5, %v1114
        %v1116 = vmul.f32 %v1111, %v1115
        %v1117 = vmul.f32 %v952, %v1116
        %vm1118 = vcmp.eq.f32.partialorder %v952, inf
        %v1119 = vsel %vm1118, %v952, %v1117
        %vm1120 = vcmp.eq.f32.partialorder %v952, 0.0
        %v1121 = vand.u32 %v952, 2147483648
        %v1122 = vsel %vm1120, %v1121, %v1119
        %v1123 = vrsqrt.pop %v953
        %v1124 = vmul.f32 %v1123, %v953
        %v1125 = vmul.f32 %v1124, %v1123
        %v1126 = vmul.f32 0.5, %v1125
        %v1127 = vsub.f32 1.5, %v1126
        %v1128 = vmul.f32 %v1123, %v1127
        %v1129 = vmul.f32 %v953, %v1128
        %vm1130 = vcmp.eq.f32.partialorder %v953, inf
        %v1131 = vsel %vm1130, %v953, %v1129
        %vm1132 = vcmp.eq.f32.partialorder %v953, 0.0
        %v1133 = vand.u32 %v953, 2147483648
        %v1134 = vsel %vm1132, %v1133, %v1131
        %v1135 = vrsqrt.pop %v954
        %v1136 = vmul.f32 %v1135, %v954
        %v1137 = vmul.f32 %v1136, %v1135
        %v1138 = vmul.f32 0.5, %v1137
        %v1139 = vsub.f32 1.5, %v1138
        %v1140 = vmul.f32 %v1135, %v1139
        %v1141 = vmul.f32 %v954, %v1140
        %vm1142 = vcmp.eq.f32.partialorder %v954, inf
        %v1143 = vsel %vm1142, %v954, %v1141
        %vm1144 = vcmp.eq.f32.partialorder %v954, 0.0
        %v1145 = vand.u32 %v954, 2147483648
        %v1146 = vsel %vm1144, %v1145, %v1143
        %1147 = vst [vmem:[%s300] sm:$0xff] %v966
        %1148 = vst [vmem:[%s300 + $0x8] sm:$0xff] %v978
        %1149 = vst [vmem:[%s300 + $0x10] sm:$0xff] %v990
        %1150 = vst [vmem:[%s300 + $0x18] sm:$0xff] %v1002
        %1151 = vst [vmem:[%s300 + $0x20] sm:$0xff] %v1014
        %1152 = vst [vmem:[%s300 + $0x28] sm:$0xff] %v1026
        %1153 = vst [vmem:[%s300 + $0x30] sm:$0xff] %v1038
        %1154 = vst [vmem:[%s300 + $0x38] sm:$0xff] %v1050
        %1155 = vst [vmem:[%s300 + $0x40] sm:$0xff] %v1062
        %1156 = vst [vmem:[%s300 + $0x48] sm:$0xff] %v1074
        %1157 = vst [vmem:[%s300 + $0x50] sm:$0xff] %v1086
        %1158 = vst [vmem:[%s300 + $0x58] sm:$0xff] %v1098
        %1159 = vst [vmem:[%s300 + $0x60] sm:$0xff] %v1110
        %1160 = vst [vmem:[%s300 + $0x68] sm:$0xff] %v1122
        %1161 = vst [vmem:[%s300 + $0x70] sm:$0xff] %v1134
        %1162 = vst [vmem:[%s300 + $0x78] sm:$0xff] %v1146
        %v1163 = vand.u32 2147483647, %v811
        %1164 = vst [vmem:[%s300 + $0x80] sm:$0x1] %v1163
        %p1165 = scmp.lt.s32.totalorder %s18, 1
        %s1166 = scalar_select %p1165, %s18, 1
        %p1167 = scmp.lt.s32.totalorder %s19, 0
        %s1168 = scalar_select %p1167, %s19, 0
        %s1169 = smul.addr %s1166, 17
        %s1170 = sadd.s32 %s1168, %s1169
        %s1171 = smul.addr %s1170, 8
        %s1172 = scalar_lea.vmem %s3, %s1171
        // Predicated region
        $region109: #{transform_forward.1} parent=99 // pred_check
          %p1173 = pneg %p125
        $region110: #{transform_forward.1} parent=99 // pred_check_branch
          %1175 = sbr.rel (%p1173) target = $region112
        $region111: #{transform_forward.1} parent=99 // pred_region
          _
        $region112: #{transform_forward.1} parent=99 // pred_fallthru
          _
      $region100: #{transform_forward.1} parent=5 // pred_fallthru
        _
      %p1176 = scmp.le.s32.totalorder 2, %s9
      // Predicated region
      $region113: #{transform_forward.1} parent=5 // pred_check
        %p1177 = pneg %p1176
      $region114: #{transform_forward.1} parent=5 // pred_check_branch
        %1179 = sbr.rel (%p1177) target = $region116
      $region115: #{transform_forward.1} parent=5 // pred_region
        %s1180 = ssub.s32 %s9, 2
        // Predicated region
        $region117: #{transform_forward.1} parent=115 // pred_check
          %p1181 = pneg %p131
        $region118: #{transform_forward.1} parent=115 // pred_check_branch
          %1183 = sbr.rel (%p1181) target = $region120
        $region119: #{transform_forward.1} parent=115 // pred_region
          %p1184 = scmp.lt.s32.totalorder %s20, 1
          %s1185 = scalar_select %p1184, %s20, 1
          %p1186 = scmp.lt.s32.totalorder %s21, 0
          %s1187 = scalar_select %p1186, %s21, 0
          %s1188 = smul.addr %s1185, 17
          %s1189 = sadd.s32 %s1187, %s1188
          %s1190 = smul.addr %s1189, 8
          %s1191 = scalar_lea.vmem %s3, %s1190
        $region120: #{transform_forward.1} parent=115 // pred_fallthru
          _
      $region116: #{transform_forward.1} parent=5 // pred_fallthru
        _
    $region6: #{transform_forward.1} parent=1 // loop_footer
      %s13 = sadd.s32 1, %s9
    $region7: #{transform_forward.1} parent=1 // loop_footer_branch
      %8 = sbr.rel target = $region3
    $region8: #{transform_forward.1} parent=1 // loop_exit
      _

</llo_original>
